<compile_context>
chip_gen: v5e
topology: v5e:2x2
jax: 0.10.0
libtpu: 0.0.40
codegen_flags: <defaults>
</compile_context>

<pallas_src>
import jax
import jax.numpy as jnp
from jax import lax
from jax.experimental import pallas as pl
from jax.experimental.pallas import tpu as pltpu


_CONTRACT_LAST = (((1,), (1,)), ((), ()))   # contract dim 1 of both operands


def _round_up(x, m):
    return ((x + m - 1) // m) * m


# ---------------------------------------------------------------------------
# Kernel
# ---------------------------------------------------------------------------
def biaffine_kernel(s_ref, we_ref, be_ref, u_ref, ht_ref, o_ref, su_ref):
    # hs and hs @ U depend only on the row tile (i): compute once per i at the
    # first column step into the VMEM scratch and reuse for every j.
    @pl.when(pl.program_id(1) == 0)
    def _():
        hs = lax.dot_general(s_ref[...], we_ref[...], _CONTRACT_LAST,
                             preferred_element_type=jnp.float32) + be_ref[...]
        su = jnp.dot(hs.astype(u_ref.dtype), u_ref[...],
                     preferred_element_type=jnp.float32)
        su_ref[...] = su.astype(su_ref.dtype)

    # Bilinear score tile: (hs @ U) @ ht^T, contracting the lane dim of both
    # operands (no transpose materialised). ht was projected in the wrapper.
    o_ref[...] = lax.dot_general(
        su_ref[...], ht_ref[...], _CONTRACT_LAST,
        preferred_element_type=jnp.float32).astype(o_ref.dtype)


# ---------------------------------------------------------------------------
# Configuration helpers
# ---------------------------------------------------------------------------
def _tpu_config():
    """Per-generation tile caps and VMEM limits."""
    kind = ""
    try:
        kind = jax.devices()[0].device_kind.lower()
    except Exception:
        pass
    if "v5" in kind or "v6" in kind:
        # v5e / v5p / v6e: 128 MiB VMEM per core -> big tiles, raised limit.
        return {"tile_cap": 512, "vmem_limit": 96 * 1024 * 1024,
                "vmem_budget": 80 * 1024 * 1024, "two_tc": "v5p" in kind}
    if "v7" in kind:
        # v7x: 64 MiB per TensorCore, 2 TCs per chip -> smaller caps, headroom.
        return {"tile_cap": 256, "vmem_limit": 48 * 1024 * 1024,
                "vmem_budget": 40 * 1024 * 1024, "two_tc": True}
    # Unknown / older generations: conservative caps, compiler-default limit.
    return {"tile_cap": 256, "vmem_limit": None,
            "vmem_budget": 24 * 1024 * 1024, "two_tc": "v4" in kind}


def _choose_tiles(num_s, num_t, d_enc, H, itemsize, cfg):
    """(tm, ms, tn, nt): 8-aligned row tiles, 128-aligned (lane-dense) column
    tiles, minimal padding, working set within the VMEM budget."""
    budget = cfg["vmem_budget"]
    cap_m = cap_n = cfg["tile_cap"]

    def tiles(cap_m, cap_n):
        nb = pl.cdiv(num_s, cap_m)
        if cfg["two_tc"] and nb < 2 and num_s >= 16:
            nb = 2            # give the second TensorCore work on the parallel axis
        tm = _round_up(pl.cdiv(num_s, nb), 8)
        nbj = pl.cdiv(num_t, cap_n)
        tn = _round_up(pl.cdiv(num_t, nbj), 128)
        return tm, nb * tm, tn, nbj * tn

    def working_set(tm, tn):
        return (2 * tm * d_enc * itemsize                       # input_s tiles
                + 2 * tn * H * itemsize                          # ht tiles
                + 2 * tm * tn * 4                                # f32 output tiles
                + 2 * (H * d_enc + H * H) * itemsize + 8 * H     # weights (worst case 2x)
                + tm * H * itemsize)                             # su scratch

    tm, ms, tn, nt = tiles(cap_m, cap_n)
    while working_set(tm, tn) > budget and (cap_n > 128 or cap_m > 8):
        if cap_n > 128:
            cap_n = max(128, cap_n // 2)
        else:
            cap_m = max(8, cap_m // 2)
        tm, ms, tn, nt = tiles(cap_m, cap_n)
    return tm, ms, tn, nt


# ---------------------------------------------------------------------------
# pallas_call builder
# ---------------------------------------------------------------------------
def _pallas_scores(s_p, we, be2, u, ht_p, *, tm, tn, vmem_limit,
                   single_buffer_weights):
    ms, d_enc = s_p.shape
    nt, H = ht_p.shape
    compute_dtype = s_p.dtype
    grid = (ms // tm, nt // tn)

    def weight_spec(shape):
        # Grid-invariant operands: constant index_map -> fetched once.
        if single_buffer_weights:
            return pl.BlockSpec(shape, lambda i, j: (0, 0),
                                pipeline_mode=pl.Buffered(1))
        return pl.BlockSpec(shape, lambda i, j: (0, 0))

    itemsize = s_p.dtype.itemsize
    flops = 2 * (ms * d_enc * H          # encoder projection (once per row tile)
                 + ms * H * H            # hs @ U            (once per row tile)
                 + ms * H * nt)          # (hs @ U) @ ht^T
    bytes_accessed = (itemsize * (ms * d_enc          # input_s, streamed once
                                  + grid[0] * nt * H  # ht, re-streamed per row tile
                                  + H * d_enc + H * H)  # resident weights
                      + 4 * (2 * H + ms * nt))          # f32 bias + output writeback

    return pl.pallas_call(
        biaffine_kernel,
        out_shape=jax.ShapeDtypeStruct((ms, nt), jnp.float32),
        grid_spec=pltpu.PrefetchScalarGridSpec(
            num_scalar_prefetch=0,
            grid=grid,
            in_specs=[
                pl.BlockSpec((tm, d_enc), lambda i, j: (i, 0)),  # input_s row tile
                weight_spec((H, d_enc)),                          # W_enc (resident)
                weight_spec((1, H)),                              # b_enc (resident)
                weight_spec((H, H)),                              # U     (resident)
                pl.BlockSpec((tn, H), lambda i, j: (j, 0)),       # ht column tile
            ],
            out_specs=pl.BlockSpec((tm, tn), lambda i, j: (i, j)),
            scratch_shapes=[pltpu.VMEM((tm, H), compute_dtype)],  # (hs @ U) cache
        ),
        compiler_params=pltpu.CompilerParams(
            dimension_semantics=("parallel", "arbitrary"),
            vmem_limit_bytes=vmem_limit,
        ),
        cost_estimate=pl.CostEstimate(
            flops=flops, transcendentals=0, bytes_accessed=bytes_accessed),
    )(s_p, we, be2, u, ht_p)


# ---------------------------------------------------------------------------
# Public forward
# ---------------------------------------------------------------------------
def _fused_xla_forward(input_s, input_t, w_enc, b_enc, w_dec, b_dec, U):
    hs = lax.dot_general(input_s, w_enc, _CONTRACT_LAST,
                         preferred_element_type=jnp.float32) + b_enc
    ht = lax.dot_general(input_t, w_dec, _CONTRACT_LAST,
                         preferred_element_type=jnp.float32) + b_dec
    su = jnp.dot(hs, U, preferred_element_type=jnp.float32)
    return lax.dot_general(su, ht, _CONTRACT_LAST,
                           preferred_element_type=jnp.float32)


_SINGLE_BUFFER_WEIGHTS_OK = None   # None = not probed yet


def biaffine_forward(input_s, input_t, w_enc, b_enc, w_dec, b_dec, U, *,
                     compute_dtype=None, force_pallas=False):
    """input_s: [num_s, D_enc], input_t: [num_t, D_dec], w_enc: [H, D_enc],
    b_enc: [H], w_dec: [H, D_dec], b_dec: [H], U: [H, H] -> [num_s, num_t] f32.

    compute_dtype: MXU operand dtype. None keeps the input dtype (module
    numerics); jnp.bfloat16 enables bf16-operand / f32-accumulate matmuls.
    (Callers may jax.jit this wrapper after the first call if desired.)
    """
    global _SINGLE_BUFFER_WEIGHTS_OK

    num_s, d_enc = input_s.shape
    num_t, d_dec = input_t.shape
    H = U.shape[0]

    # Small-problem fast path: a fused XLA computation beats pallas_call launch
    # overhead + lane padding when everything fits in roughly one tile.
    if not force_pallas and num_s <= 128 and num_t <= 128:
        return _fused_xla_forward(input_s, input_t, w_enc, b_enc, w_dec, b_dec, U)

    if compute_dtype is None:
        compute_dtype = input_s.dtype
    compute_dtype = jnp.dtype(compute_dtype)

    cfg = _tpu_config()
    tm, ms, tn, nt = _choose_tiles(num_s, num_t, d_enc, H,
                                   compute_dtype.itemsize, cfg)

    # Encoder-side kernel operands: cast only when needed, pad rows minimally.
    s_p = input_s if input_s.dtype == compute_dtype else input_s.astype(compute_dtype)
    if ms != num_s:
        s_p = jnp.pad(s_p, ((0, ms - num_s), (0, 0)))
    we = w_enc if w_enc.dtype == compute_dtype else w_enc.astype(compute_dtype)
    u = U if U.dtype == compute_dtype else U.astype(compute_dtype)
    be2 = b_enc.reshape(1, H).astype(jnp.float32)   # bias added in f32

    # Decoder projection depends only on the column axis: compute ONCE here
    # (tiny matmul) instead of once per (i, j) grid step inside the kernel.
    ht = lax.dot_general(input_t, w_dec, _CONTRACT_LAST,
                         preferred_element_type=jnp.float32) + b_dec
    ht = ht.astype(compute_dtype)
    if nt != num_t:
        ht = jnp.pad(ht, ((0, nt - num_t), (0, 0)))

    kwargs = dict(tm=tm, tn=tn, vmem_limit=cfg["vmem_limit"])

    if _SINGLE_BUFFER_WEIGHTS_OK is None:
        # Probe once: single-buffered resident weights (pl.Buffered(1)) save
        # VMEM but may not be accepted by every pipeline; fall back cleanly.
        try:
            out = _pallas_scores(s_p, we, be2, u, ht,
                                 single_buffer_weights=True, **kwargs)
            out = jax.block_until_ready(out)
            _SINGLE_BUFFER_WEIGHTS_OK = True
            return out[:num_s, :num_t]
        except Exception:
            _SINGLE_BUFFER_WEIGHTS_OK = False

    out = _pallas_scores(s_p, we, be2, u, ht,
                         single_buffer_weights=_SINGLE_BUFFER_WEIGHTS_OK,
                         **kwargs)
    return out[:num_s, :num_t]


def reference_forward(input_s, input_t, w_enc, b_enc, w_dec, b_dec, U):
    hs = input_s @ w_enc.T + b_enc
    ht = input_t @ w_dec.T + b_dec
    return (hs @ U) @ ht.T


# ---------------------------------------------------------------------------
# Demo / self-test
# ---------------------------------------------------------------------------
if __name__ == "__main__":
    key = jax.random.PRNGKey(0)

    def make_inputs(key, num_s, num_t, d_enc, d_dec, hidden):
        k = jax.random.split(key, 7)
        input_s = jax.random.normal(k[0], (num_s, d_enc), dtype=jnp.float32)
        input_t = jax.random.normal(k[1], (num_t, d_dec), dtype=jnp.float32)
        # nn.Linear-style init: U(-1/sqrt(fan_in), 1/sqrt(fan_in))
        w_enc = jax.random.uniform(k[2], (hidden, d_enc), minval=-1.0, maxval=1.0) / jnp.sqrt(d_enc)
        b_enc = jax.random.uniform(k[3], (hidden,), minval=-1.0, maxval=1.0) / jnp.sqrt(d_enc)
        w_dec = jax.random.uniform(k[4], (hidden, d_dec), minval=-1.0, maxval=1.0) / jnp.sqrt(d_dec)
        b_dec = jax.random.uniform(k[5], (hidden,), minval=-1.0, maxval=1.0) / jnp.sqrt(d_dec)
        # U: xavier normal, std = sqrt(2 / (H + H))
        U = jax.random.normal(k[6], (hidden, hidden)) * jnp.sqrt(2.0 / (2 * hidden))
        return input_s, input_t, w_enc, b_enc, w_dec, b_dec, U

    k1, k2 = jax.random.split(key)

    # (1) Shipped shapes (num_languages=8, num_teachers=8, sizes=32), forced
    #     through the Pallas kernel (f32 path).
    args_small = make_inputs(k1, 8, 8, 32, 32, 32)
    ref_small = reference_forward(*args_small)
    out_small = jax.block_until_ready(biaffine_forward(*args_small, force_pallas=True))
    assert out_small.shape == (8, 8)
    assert jnp.allclose(out_small, ref_small, atol=2e-4, rtol=2e-4)

    # (2) Same shapes via the small-problem fast path (auto dispatch).
    out_fast = jax.block_until_ready(biaffine_forward(*args_small))
    assert jnp.allclose(out_fast, ref_small, atol=2e-4, rtol=2e-4)

    # (3) Multi-tile problem: padding, per-row-tile hs@U caching, streamed ht.
    args_big = make_inputs(k2, 520, 700, 96, 80, 160)
    ref_big = reference_forward(*args_big)
    out_big = jax.block_until_ready(biaffine_forward(*args_big))
    assert out_big.shape == (520, 700)
    assert jnp.allclose(out_big, ref_big, atol=1e-3, rtol=1e-3)

    # (4) bf16-operand / f32-accumulate MXU path (gated behind compute_dtype).
    out_bf16 = jax.block_until_ready(
        biaffine_forward(*args_big, compute_dtype=jnp.bfloat16))
    rel_err = jnp.linalg.norm(out_bf16 - ref_big) / jnp.linalg.norm(ref_big)
    assert float(rel_err) < 2e-2

    print("KERNEL_OK")
</pallas_src>

<mosaic_0001>
module attributes {stable_mosaic.version = 11 : i64} {
  func.func @biaffine_kernel(%arg0: i32, %arg1: i32, %arg2: memref<8x32xf32, #tpu.memory_space<vmem>>, %arg3: memref<32x32xf32, #tpu.memory_space<vmem>>, %arg4: memref<1x32xf32, #tpu.memory_space<vmem>>, %arg5: memref<32x32xf32, #tpu.memory_space<vmem>>, %arg6: memref<128x32xf32, #tpu.memory_space<vmem>>, %arg7: memref<8x128xf32, #tpu.memory_space<vmem>>, %arg8: memref<8x32xf32, #tpu.memory_space<vmem>>) attributes {dimension_semantics = [#tpu.dimension_semantics<parallel>, #tpu.dimension_semantics<arbitrary>], iteration_bounds = array<i64: 1, 1>, scalar_prefetch = 0 : i64, scratch_operands = 1 : i64, tpu.core_type = #tpu.core_type<tc>, window_params = [{transform_indices = @transform_0, window_bounds = array<i64: 8, 32>}, {pipeline_mode = #tpu.pipeline_mode<synchronous>, transform_indices = @transform_1, window_bounds = array<i64: 32, 32>}, {pipeline_mode = #tpu.pipeline_mode<synchronous>, transform_indices = @transform_2, window_bounds = array<i64: 1, 32>}, {pipeline_mode = #tpu.pipeline_mode<synchronous>, transform_indices = @transform_3, window_bounds = array<i64: 32, 32>}, {transform_indices = @transform_4, window_bounds = array<i64: 128, 32>}, {transform_indices = @transform_5, window_bounds = array<i64: 8, 128>}]} {
    %c0_i32 = arith.constant 0 : i32
    %0 = arith.cmpi eq, %arg1, %c0_i32 : i32
    %1 = arith.extui %0 : i1 to i32
    %c0_i32_0 = arith.constant 0 : i32
    %2 = arith.cmpi ne, %1, %c0_i32_0 : i32
    scf.if %2 {
      %c0_6 = arith.constant 0 : index
      %c0_7 = arith.constant 0 : index
      %7 = vector.load %arg2[%c0_6, %c0_7] : memref<8x32xf32, #tpu.memory_space<vmem>>, vector<8x32xf32>
      %c0_8 = arith.constant 0 : index
      %c0_9 = arith.constant 0 : index
      %8 = vector.load %arg3[%c0_8, %c0_9] : memref<32x32xf32, #tpu.memory_space<vmem>>, vector<32x32xf32>
      %cst_10 = arith.constant dense<0.000000e+00> : vector<8x32xf32>
      %9 = tpu.matmul %7, %8, %cst_10 {dimension_numbers = #tpu.dot_dimension_numbers<[1], [1], [0], [0], [0, 0, 1, 0], [], []>} : vector<8x32xf32>, vector<32x32xf32>, vector<8x32xf32> -> vector<8x32xf32>
      %c0_11 = arith.constant 0 : index
      %c0_12 = arith.constant 0 : index
      %10 = vector.load %arg4[%c0_11, %c0_12] : memref<1x32xf32, #tpu.memory_space<vmem>>, vector<1x32xf32>
      %11 = vector.broadcast %10 : vector<1x32xf32> to vector<8x32xf32>
      %12 = arith.addf %9, %11 : vector<8x32xf32>
      %c0_13 = arith.constant 0 : index
      %c0_14 = arith.constant 0 : index
      %13 = vector.load %arg5[%c0_13, %c0_14] : memref<32x32xf32, #tpu.memory_space<vmem>>, vector<32x32xf32>
      %cst_15 = arith.constant dense<0.000000e+00> : vector<8x32xf32>
      %14 = tpu.matmul %12, %13, %cst_15 {dimension_numbers = #tpu.dot_dimension_numbers<[1], [0], [0], [1], [0, 0, 1, 1], [], []>} : vector<8x32xf32>, vector<32x32xf32>, vector<8x32xf32> -> vector<8x32xf32>
      %c0_16 = arith.constant 0 : index
      %c0_17 = arith.constant 0 : index
      %15 = vector.load %arg8[%c0_16, %c0_17] : memref<8x32xf32, #tpu.memory_space<vmem>>, vector<8x32xf32>
      tpu.vector_store %arg8[%c0_16, %c0_17], %14 {strides = array<i32>} : memref<8x32xf32, #tpu.memory_space<vmem>>, vector<8x32xf32>,
    } else {
    }
    %c0 = arith.constant 0 : index
    %c0_1 = arith.constant 0 : index
    %3 = vector.load %arg8[%c0, %c0_1] : memref<8x32xf32, #tpu.memory_space<vmem>>, vector<8x32xf32>
    %c0_2 = arith.constant 0 : index
    %c0_3 = arith.constant 0 : index
    %4 = vector.load %arg6[%c0_2, %c0_3] : memref<128x32xf32, #tpu.memory_space<vmem>>, vector<128x32xf32>
    %cst = arith.constant dense<0.000000e+00> : vector<8x128xf32>
    %5 = tpu.matmul %3, %4, %cst {dimension_numbers = #tpu.dot_dimension_numbers<[1], [1], [0], [0], [0, 0, 1, 0], [], []>} : vector<8x32xf32>, vector<128x32xf32>, vector<8x128xf32> -> vector<8x128xf32>
    %c0_4 = arith.constant 0 : index
    %c0_5 = arith.constant 0 : index
    %6 = vector.load %arg7[%c0_4, %c0_5] : memref<8x128xf32, #tpu.memory_space<vmem>>, vector<8x128xf32>
    tpu.vector_store %arg7[%c0_4, %c0_5], %5 {strides = array<i32>} : memref<8x128xf32, #tpu.memory_space<vmem>>, vector<8x128xf32>,
    return
  }
  func.func @transform_0(%arg0: i32, %arg1: i32) -> (i32, i32) {
    %c0_i32 = arith.constant 0 : i32
    %c0_i32_0 = arith.constant 0 : i32
    return %arg0, %c0_i32 : i32, i32
  }
  func.func @transform_1(%arg0: i32, %arg1: i32) -> (i32, i32) {
    %c0_i32 = arith.constant 0 : i32
    %c0_i32_0 = arith.constant 0 : i32
    %c0_i32_1 = arith.constant 0 : i32
    return %c0_i32, %c0_i32_0 : i32, i32
  }
  func.func @transform_2(%arg0: i32, %arg1: i32) -> (i32, i32) {
    %c0_i32 = arith.constant 0 : i32
    %c0_i32_0 = arith.constant 0 : i32
    %c0_i32_1 = arith.constant 0 : i32
    return %c0_i32, %c0_i32_0 : i32, i32
  }
  func.func @transform_3(%arg0: i32, %arg1: i32) -> (i32, i32) {
    %c0_i32 = arith.constant 0 : i32
    %c0_i32_0 = arith.constant 0 : i32
    %c0_i32_1 = arith.constant 0 : i32
    return %c0_i32, %c0_i32_0 : i32, i32
  }
  func.func @transform_4(%arg0: i32, %arg1: i32) -> (i32, i32) {
    %c0_i32 = arith.constant 0 : i32
    %c0_i32_0 = arith.constant 0 : i32
    return %arg1, %c0_i32 : i32, i32
  }
  func.func @transform_5(%arg0: i32, %arg1: i32) -> (i32, i32) {
    %c0_i32 = arith.constant 0 : i32
    return %arg0, %arg1 : i32, i32
  }
}

module attributes {stable_mosaic.version = 11 : i64} {
  func.func @biaffine_kernel(%arg0: i32, %arg1: i32, %arg2: memref<8x32xf32, #tpu.memory_space<vmem>>, %arg3: memref<32x32xf32, #tpu.memory_space<vmem>>, %arg4: memref<1x32xf32, #tpu.memory_space<vmem>>, %arg5: memref<32x32xf32, #tpu.memory_space<vmem>>, %arg6: memref<128x32xf32, #tpu.memory_space<vmem>>, %arg7: memref<8x128xf32, #tpu.memory_space<vmem>>, %arg8: memref<8x32xf32, #tpu.memory_space<vmem>>) attributes {dimension_semantics = [#tpu.dimension_semantics<parallel>, #tpu.dimension_semantics<arbitrary>], iteration_bounds = array<i64: 1, 1>, scalar_prefetch = 0 : i64, scratch_operands = 1 : i64, tpu.core_type = #tpu.core_type<tc>, window_params = [{transform_indices = @transform_0, window_bounds = array<i64: 8, 32>}, {pipeline_mode = #tpu.pipeline_mode<synchronous>, transform_indices = @transform_1, window_bounds = array<i64: 32, 32>}, {pipeline_mode = #tpu.pipeline_mode<synchronous>, transform_indices = @transform_2, window_bounds = array<i64: 1, 32>}, {pipeline_mode = #tpu.pipeline_mode<synchronous>, transform_indices = @transform_3, window_bounds = array<i64: 32, 32>}, {transform_indices = @transform_4, window_bounds = array<i64: 128, 32>}, {transform_indices = @transform_5, window_bounds = array<i64: 8, 128>}]} {
    %c0_i32 = arith.constant 0 : i32
    %0 = arith.cmpi eq, %arg1, %c0_i32 : i32
    %1 = arith.extui %0 : i1 to i32
    %c0_i32_0 = arith.constant 0 : i32
    %2 = arith.cmpi ne, %1, %c0_i32_0 : i32
    scf.if %2 {
      %c0_6 = arith.constant 0 : index
      %c0_7 = arith.constant 0 : index
      %7 = vector.load %arg2[%c0_6, %c0_7] : memref<8x32xf32, #tpu.memory_space<vmem>>, vector<8x32xf32>
      %c0_8 = arith.constant 0 : index
      %c0_9 = arith.constant 0 : index
      %8 = vector.load %arg3[%c0_8, %c0_9] : memref<32x32xf32, #tpu.memory_space<vmem>>, vector<32x32xf32>
      %cst_10 = arith.constant dense<0.000000e+00> : vector<8x32xf32>
      %9 = tpu.matmul %7, %8, %cst_10 {dimension_numbers = #tpu.dot_dimension_numbers<[1], [1], [0], [0], [0, 0, 1, 0], [], []>} : vector<8x32xf32>, vector<32x32xf32>, vector<8x32xf32> -> vector<8x32xf32>
      %c0_11 = arith.constant 0 : index
      %c0_12 = arith.constant 0 : index
      %10 = vector.load %arg4[%c0_11, %c0_12] : memref<1x32xf32, #tpu.memory_space<vmem>>, vector<1x32xf32>
      %11 = vector.broadcast %10 : vector<1x32xf32> to vector<8x32xf32>
      %12 = arith.addf %9, %11 : vector<8x32xf32>
      %c0_13 = arith.constant 0 : index
      %c0_14 = arith.constant 0 : index
      %13 = vector.load %arg5[%c0_13, %c0_14] : memref<32x32xf32, #tpu.memory_space<vmem>>, vector<32x32xf32>
      %cst_15 = arith.constant dense<0.000000e+00> : vector<8x32xf32>
      %14 = tpu.matmul %12, %13, %cst_15 {dimension_numbers = #tpu.dot_dimension_numbers<[1], [0], [0], [1], [0, 0, 1, 1], [], []>} : vector<8x32xf32>, vector<32x32xf32>, vector<8x32xf32> -> vector<8x32xf32>
      %c0_16 = arith.constant 0 : index
      %c0_17 = arith.constant 0 : index
      %15 = vector.load %arg8[%c0_16, %c0_17] : memref<8x32xf32, #tpu.memory_space<vmem>>, vector<8x32xf32>
      tpu.vector_store %arg8[%c0_16, %c0_17], %14 {strides = array<i32>} : memref<8x32xf32, #tpu.memory_space<vmem>>, vector<8x32xf32>,
    } else {
    }
    %c0 = arith.constant 0 : index
    %c0_1 = arith.constant 0 : index
    %3 = vector.load %arg8[%c0, %c0_1] : memref<8x32xf32, #tpu.memory_space<vmem>>, vector<8x32xf32>
    %c0_2 = arith.constant 0 : index
    %c0_3 = arith.constant 0 : index
    %4 = vector.load %arg6[%c0_2, %c0_3] : memref<128x32xf32, #tpu.memory_space<vmem>>, vector<128x32xf32>
    %cst = arith.constant dense<0.000000e+00> : vector<8x128xf32>
    %5 = tpu.matmul %3, %4, %cst {dimension_numbers = #tpu.dot_dimension_numbers<[1], [1], [0], [0], [0, 0, 1, 0], [], []>} : vector<8x32xf32>, vector<128x32xf32>, vector<8x128xf32> -> vector<8x128xf32>
    %c0_4 = arith.constant 0 : index
    %c0_5 = arith.constant 0 : index
    %6 = vector.load %arg7[%c0_4, %c0_5] : memref<8x128xf32, #tpu.memory_space<vmem>>, vector<8x128xf32>
    tpu.vector_store %arg7[%c0_4, %c0_5], %5 {strides = array<i32>} : memref<8x128xf32, #tpu.memory_space<vmem>>, vector<8x128xf32>,
    return
  }
  func.func @transform_0(%arg0: i32, %arg1: i32) -> (i32, i32) {
    %c0_i32 = arith.constant 0 : i32
    %c0_i32_0 = arith.constant 0 : i32
    return %arg0, %c0_i32 : i32, i32
  }
  func.func @transform_1(%arg0: i32, %arg1: i32) -> (i32, i32) {
    %c0_i32 = arith.constant 0 : i32
    %c0_i32_0 = arith.constant 0 : i32
    %c0_i32_1 = arith.constant 0 : i32
    return %c0_i32, %c0_i32_0 : i32, i32
  }
  func.func @transform_2(%arg0: i32, %arg1: i32) -> (i32, i32) {
    %c0_i32 = arith.constant 0 : i32
    %c0_i32_0 = arith.constant 0 : i32
    %c0_i32_1 = arith.constant 0 : i32
    return %c0_i32, %c0_i32_0 : i32, i32
  }
  func.func @transform_3(%arg0: i32, %arg1: i32) -> (i32, i32) {
    %c0_i32 = arith.constant 0 : i32
    %c0_i32_0 = arith.constant 0 : i32
    %c0_i32_1 = arith.constant 0 : i32
    return %c0_i32, %c0_i32_0 : i32, i32
  }
  func.func @transform_4(%arg0: i32, %arg1: i32) -> (i32, i32) {
    %c0_i32 = arith.constant 0 : i32
    %c0_i32_0 = arith.constant 0 : i32
    return %arg1, %c0_i32 : i32, i32
  }
  func.func @transform_5(%arg0: i32, %arg1: i32) -> (i32, i32) {
    %c0_i32 = arith.constant 0 : i32
    return %arg0, %arg1 : i32, i32
  }
}

</mosaic_0001>

<llo_original>
// kernel: tpu_custom_call.1
$region0: #{tpu_custom_call.1}
  #allocation0 [shape = 'u32[]', space=smem, size = 0x4, offset = 0x4, fixed_abs, tag = 'smem constant byte address 0x4 - core index']
  #allocation1 [shape = 'u32[72,128]{1,0:T(1,128)}', space=vmem, size = 0x9000, scoped, tag = 'internal scratch']
  #allocation2 [shape = 'f32[8,32]{1,0:T(8,128)}', space=vmem, size = 0x1000, scoped, tag = 'scratch operand']
  %s0 = inlined_call_operand.vmem [shape: f32[8,32], index: 0, kind: input, shape index: {}]
  %s1 = inlined_call_operand.vmem [shape: f32[32,32], index: 1, kind: input, shape index: {}]
  %s2 = inlined_call_operand.vmem [shape: f32[1,32], index: 2, kind: input, shape index: {}]
  %s3 = inlined_call_operand.vmem [shape: f32[32,32], index: 3, kind: input, shape index: {}]
  %s4 = inlined_call_operand.vmem [shape: f32[128,32], index: 4, kind: input, shape index: {}]
  %s5 = inlined_call_operand.hbm [shape: f32[8,128], index: 5, kind: output, shape index: {}]
  %s6 = sld [smem:[#allocation0]]
  $region34: #{tpu_custom_call.1} parent=0
    _
  %s8 = ssub.s32 1, %s6
  %s9 = scalar_select 0, %s8, %s6
  $region1: #{tpu_custom_call.1} parent=0
    #allocation3 [shape = 'u8[4096]{0}', space=vmem, size = 0x1000, scoped, tag = 'output window, operand 0, single buffered']
    #allocation4 [shape = 's32[1]{0}', space=sflag, size = 0x4, scoped, tag = 'scoped memory for tpu_custom_call.1']
    %10 = vsyncpa [#allocation4], 0
    // Predicated region
    $region2: #{tpu_custom_call.1} parent=1 // pred_check
      _
    $region3: #{tpu_custom_call.1} parent=1 // pred_check_branch
      %12 = sbr.rel (0) target = $region5
    $region4: #{tpu_custom_call.1} parent=1 // pred_region
      _
    $region5: #{tpu_custom_call.1} parent=1 // pred_fallthru
      _
    // Predicated region
    $region6: #{tpu_custom_call.1} parent=1 // pred_check
      _
    $region7: #{tpu_custom_call.1} parent=1 // pred_check_branch
      %14 = sbr.rel (0) target = $region9
    $region8: #{tpu_custom_call.1} parent=1 // pred_region
      _
    $region9: #{tpu_custom_call.1} parent=1 // pred_fallthru
      _
    // Predicated region
    $region10: #{tpu_custom_call.1} parent=1 // pred_check
      _
    $region11: #{tpu_custom_call.1} parent=1 // pred_check_branch
      %16 = sbr.rel (0) target = $region13
    $region12: #{tpu_custom_call.1} parent=1 // pred_region
      _
    $region13: #{tpu_custom_call.1} parent=1 // pred_fallthru
      _
    // Predicated region
    $region14: #{tpu_custom_call.1} parent=1 // pred_check
      _
    $region15: #{tpu_custom_call.1} parent=1 // pred_check_branch
      %18 = sbr.rel (0) target = $region17
    $region16: #{tpu_custom_call.1} parent=1 // pred_region
      _
    $region17: #{tpu_custom_call.1} parent=1 // pred_fallthru
      _
    // Predicated region
    $region18: #{tpu_custom_call.1} parent=1 // pred_check
      _
    $region19: #{tpu_custom_call.1} parent=1 // pred_check_branch
      %20 = sbr.rel (0) target = $region21
    $region20: #{tpu_custom_call.1} parent=1 // pred_region
      _
    $region21: #{tpu_custom_call.1} parent=1 // pred_fallthru
      _
    %p21 = scmp.eq.s32.totalorder 0, 0
    // Predicated region
    $region22: #{tpu_custom_call.1} parent=1 // pred_check
      %p22 = pneg %p21
    $region23: #{tpu_custom_call.1} parent=1 // pred_check_branch
      %24 = sbr.rel (%p22) target = $region25
    $region24: #{tpu_custom_call.1} parent=1 // pred_region
      %v25 = vld [vmem:[%s0] sm:$0xff]
      %v26 = vld [vmem:[%s1] sm:$0xff]
      %v27 = vld [vmem:[%s1 + $0x8] sm:$0xff]
      %v28 = vld [vmem:[%s1 + $0x10] sm:$0xff]
      %v29 = vld [vmem:[%s1 + $0x18] sm:$0xff]
      %v30 = vld [vmem:[%s2] sm:$0x1]
      %v32 = vperm.slane %v30, 0
      %vm34 = vcmask 261120
      %v36 = vsel %vm34, %v25, 0
      %v39 = vsel %vm34, %v26, 0
      %v42 = vsel %vm34, %v27, 0
      %v45 = vsel %vm34, %v28, 0
      %v48 = vsel %vm34, %v29, 0
      %50 = vmatpush.xpose.msra.mxu0 0.0
      %51 = vmatpush.xpose.msra.mxu0 0.0
      %52 = vmatpush.xpose.msra.mxu0 0.0
      %53 = vmatpush.xpose.msra.mxu0 0.0
      %54 = vmatpush.xpose.msra.mxu0 0.0
      %55 = vmatpush.xpose.msra.mxu0 0.0
      %56 = vmatpush.xpose.msra.mxu0 0.0
      %57 = vmatpush.xpose.msra.mxu0 0.0
      %58 = vmatpush.xpose.msra.mxu0 0.0
      %59 = vmatpush.xpose.msra.mxu0 0.0
      %60 = vmatpush.xpose.msra.mxu0 0.0
      %61 = vmatpush.xpose.msra.mxu0 0.0
      %62 = vmatpush.xpose.msra.mxu0 %v48
      %63 = vmatpush.xpose.msra.mxu0 %v45
      %64 = vmatpush.xpose.msra.mxu0 %v42
      %65 = vmatpush.xpose.msra.mxu0 %v39
      %66 = vmatmul.f32.gmra.mxu0 %v36
      %v67 = vpop.f32.mrf.mxu0
      %v68 = vadd.f32 %v32, %v67
      %69 = vdwg.mxu0
      %v70 = vld [vmem:[%s3] sm:$0xff]
      %v71 = vld [vmem:[%s3 + $0x8] sm:$0xff]
      %v72 = vld [vmem:[%s3 + $0x10] sm:$0xff]
      %v73 = vld [vmem:[%s3 + $0x18] sm:$0xff]
      %v75 = vsel %vm34, %v68, 0
      %77 = vmatpush.msra.mxu0 0.0
      %78 = vmatpush.msra.mxu0 0.0
      %79 = vmatpush.msra.mxu0 0.0
      %80 = vmatpush.msra.mxu0 0.0
      %81 = vmatpush.msra.mxu0 0.0
      %82 = vmatpush.msra.mxu0 0.0
      %83 = vmatpush.msra.mxu0 0.0
      %84 = vmatpush.msra.mxu0 0.0
      %85 = vmatpush.msra.mxu0 0.0
      %86 = vmatpush.msra.mxu0 0.0
      %87 = vmatpush.msra.mxu0 0.0
      %88 = vmatpush.msra.mxu0 0.0
      %89 = vmatpush.msra.mxu0 %v73
      %90 = vmatpush.msra.mxu0 %v72
      %91 = vmatpush.msra.mxu0 %v71
      %92 = vmatpush.msra.mxu0 %v70
      %93 = vmatmul.f32.gmra.mxu0 %v75
      %v94 = vpop.f32.mrf.mxu0
      %v95 = vadd.f32 0.0, %v94
      %96 = vdwg.mxu0
      %97 = vst.msk [vmem:[#allocation2] sm:$0xff] %vm34, %v95
    $region25: #{tpu_custom_call.1} parent=1 // pred_fallthru
      _
    %v98 = vld [vmem:[#allocation2] sm:$0xff]
    %v99 = vld [vmem:[%s4] sm:$0xff]
    %v100 = vld [vmem:[%s4 + $0x8] sm:$0xff]
    %v101 = vld [vmem:[%s4 + $0x10] sm:$0xff]
    %v102 = vld [vmem:[%s4 + $0x18] sm:$0xff]
    %v103 = vld [vmem:[%s4 + $0x20] sm:$0xff]
    %v104 = vld [vmem:[%s4 + $0x28] sm:$0xff]
    %v105 = vld [vmem:[%s4 + $0x30] sm:$0xff]
    %v106 = vld [vmem:[%s4 + $0x38] sm:$0xff]
    %v107 = vld [vmem:[%s4 + $0x40] sm:$0xff]
    %v108 = vld [vmem:[%s4 + $0x48] sm:$0xff]
    %v109 = vld [vmem:[%s4 + $0x50] sm:$0xff]
    %v110 = vld [vmem:[%s4 + $0x58] sm:$0xff]
    %v111 = vld [vmem:[%s4 + $0x60] sm:$0xff]
    %v112 = vld [vmem:[%s4 + $0x68] sm:$0xff]
    %v113 = vld [vmem:[%s4 + $0x70] sm:$0xff]
    %v114 = vld [vmem:[%s4 + $0x78] sm:$0xff]
    %vm115 = vcmask 261120
    %v117 = vsel %vm115, %v98, 0
    %v120 = vsel %vm115, %v99, 0
    %v123 = vsel %vm115, %v100, 0
    %v126 = vsel %vm115, %v101, 0
    %v129 = vsel %vm115, %v102, 0
    %v132 = vsel %vm115, %v103, 0
    %v135 = vsel %vm115, %v104, 0
    %v138 = vsel %vm115, %v105, 0
    %v141 = vsel %vm115, %v106, 0
    %v144 = vsel %vm115, %v107, 0
    %v147 = vsel %vm115, %v108, 0
    %v150 = vsel %vm115, %v109, 0
    %v153 = vsel %vm115, %v110, 0
    %v156 = vsel %vm115, %v111, 0
    %v159 = vsel %vm115, %v112, 0
    %v162 = vsel %vm115, %v113, 0
    %v165 = vsel %vm115, %v114, 0
    %167 = vmatpush.xpose.msra.mxu0 %v165
    %168 = vmatpush.xpose.msra.mxu0 %v162
    %169 = vmatpush.xpose.msra.mxu0 %v159
    %170 = vmatpush.xpose.msra.mxu0 %v156
    %171 = vmatpush.xpose.msra.mxu0 %v153
    %172 = vmatpush.xpose.msra.mxu0 %v150
    %173 = vmatpush.xpose.msra.mxu0 %v147
    %174 = vmatpush.xpose.msra.mxu0 %v144
    %175 = vmatpush.xpose.msra.mxu0 %v141
    %176 = vmatpush.xpose.msra.mxu0 %v138
    %177 = vmatpush.xpose.msra.mxu0 %v135
    %178 = vmatpush.xpose.msra.mxu0 %v132
    %179 = vmatpush.xpose.msra.mxu0 %v129
    %180 = vmatpush.xpose.msra.mxu0 %v126
    %181 = vmatpush.xpose.msra.mxu0 %v123
    %182 = vmatpush.xpose.msra.mxu0 %v120
    %183 = vmatmul.f32.gmra.mxu0 %v117
    %v184 = vpop.f32.mrf.mxu0
    %v185 = vadd.f32 0.0, %v184
    %186 = vdwg.mxu0
    %187 = vst [vmem:[#allocation3] sm:$0xff] %v185
    // Predicated region
    $region26: #{tpu_custom_call.1} parent=1 // pred_check
      _
    $region27: #{tpu_custom_call.1} parent=1 // pred_check_branch
      %189 = sbr.rel (0) target = $region29
    $region28: #{tpu_custom_call.1} parent=1 // pred_region
      %191 = vsyncadd [#allocation4], 0
      %s193 = sshll.u32 [#allocation3], 4
      %s194 = int_to_ptr.vmem [resolvable:$true] %s193
      %s195 = sshll.u32 %s5, 4
      %s196 = int_to_ptr.hbm [resolvable:$true] %s195
      %198 = dma.vmem_to_hbm [thread:$0]  %s194, 128, %s196, [#allocation4]
    $region29: #{tpu_custom_call.1} parent=1 // pred_fallthru
      _
    // Predicated region
    $region30: #{tpu_custom_call.1} parent=1 // pred_check
      _
    $region31: #{tpu_custom_call.1} parent=1 // pred_check_branch
      %200 = sbr.rel (0) target = $region33
    $region32: #{tpu_custom_call.1} parent=1 // pred_region
      %202 = dma.done [#allocation4], 128
    $region33: #{tpu_custom_call.1} parent=1 // pred_fallthru
      _
    %203 = vsyncpa [#allocation4], 1

// kernel: tpu_custom_call.1
$region0: #{tpu_custom_call.1}
  #allocation0 [shape = 'u32[]', space=smem, size = 0x4, offset = 0x4, fixed_abs, tag = 'smem constant byte address 0x4 - core index']
  #allocation1 [shape = 'u32[72,128]{1,0:T(1,128)}', space=vmem, size = 0x9000, scoped, tag = 'internal scratch']
  #allocation2 [shape = 'f32[8,32]{1,0:T(8,128)}', space=vmem, size = 0x1000, scoped, tag = 'scratch operand']
  %s0 = inlined_call_operand.vmem [shape: f32[8,32], index: 0, kind: input, shape index: {}]
  %s1 = inlined_call_operand.vmem [shape: f32[32,32], index: 1, kind: input, shape index: {}]
  %s2 = inlined_call_operand.vmem [shape: f32[1,32], index: 2, kind: input, shape index: {}]
  %s3 = inlined_call_operand.vmem [shape: f32[32,32], index: 3, kind: input, shape index: {}]
  %s4 = inlined_call_operand.vmem [shape: f32[128,32], index: 4, kind: input, shape index: {}]
  %s5 = inlined_call_operand.hbm [shape: f32[8,128], index: 5, kind: output, shape index: {}]
  %s6 = sld [smem:[#allocation0]]
  $region34: #{tpu_custom_call.1} parent=0
    _
  %s8 = ssub.s32 1, %s6
  %s9 = scalar_select 0, %s8, %s6
  $region1: #{tpu_custom_call.1} parent=0
    #allocation3 [shape = 'u8[4096]{0}', space=vmem, size = 0x1000, scoped, tag = 'output window, operand 0, single buffered']
    #allocation4 [shape = 's32[1]{0}', space=sflag, size = 0x4, scoped, tag = 'scoped memory for tpu_custom_call.1']
    %10 = vsyncpa [#allocation4], 0
    // Predicated region
    $region2: #{tpu_custom_call.1} parent=1 // pred_check
      _
    $region3: #{tpu_custom_call.1} parent=1 // pred_check_branch
      %12 = sbr.rel (0) target = $region5
    $region4: #{tpu_custom_call.1} parent=1 // pred_region
      _
    $region5: #{tpu_custom_call.1} parent=1 // pred_fallthru
      _
    // Predicated region
    $region6: #{tpu_custom_call.1} parent=1 // pred_check
      _
    $region7: #{tpu_custom_call.1} parent=1 // pred_check_branch
      %14 = sbr.rel (0) target = $region9
    $region8: #{tpu_custom_call.1} parent=1 // pred_region
      _
    $region9: #{tpu_custom_call.1} parent=1 // pred_fallthru
      _
    // Predicated region
    $region10: #{tpu_custom_call.1} parent=1 // pred_check
      _
    $region11: #{tpu_custom_call.1} parent=1 // pred_check_branch
      %16 = sbr.rel (0) target = $region13
    $region12: #{tpu_custom_call.1} parent=1 // pred_region
      _
    $region13: #{tpu_custom_call.1} parent=1 // pred_fallthru
      _
    // Predicated region
    $region14: #{tpu_custom_call.1} parent=1 // pred_check
      _
    $region15: #{tpu_custom_call.1} parent=1 // pred_check_branch
      %18 = sbr.rel (0) target = $region17
    $region16: #{tpu_custom_call.1} parent=1 // pred_region
      _
    $region17: #{tpu_custom_call.1} parent=1 // pred_fallthru
      _
    // Predicated region
    $region18: #{tpu_custom_call.1} parent=1 // pred_check
      _
    $region19: #{tpu_custom_call.1} parent=1 // pred_check_branch
      %20 = sbr.rel (0) target = $region21
    $region20: #{tpu_custom_call.1} parent=1 // pred_region
      _
    $region21: #{tpu_custom_call.1} parent=1 // pred_fallthru
      _
    %p21 = scmp.eq.s32.totalorder 0, 0
    // Predicated region
    $region22: #{tpu_custom_call.1} parent=1 // pred_check
      %p22 = pneg %p21
    $region23: #{tpu_custom_call.1} parent=1 // pred_check_branch
      %24 = sbr.rel (%p22) target = $region25
    $region24: #{tpu_custom_call.1} parent=1 // pred_region
      %v25 = vld [vmem:[%s0] sm:$0xff]
      %v26 = vld [vmem:[%s1] sm:$0xff]
      %v27 = vld [vmem:[%s1 + $0x8] sm:$0xff]
      %v28 = vld [vmem:[%s1 + $0x10] sm:$0xff]
      %v29 = vld [vmem:[%s1 + $0x18] sm:$0xff]
      %v30 = vld [vmem:[%s2] sm:$0x1]
      %v32 = vperm.slane %v30, 0
      %vm34 = vcmask 261120
      %v36 = vsel %vm34, %v25, 0
      %v39 = vsel %vm34, %v26, 0
      %v42 = vsel %vm34, %v27, 0
      %v45 = vsel %vm34, %v28, 0
      %v48 = vsel %vm34, %v29, 0
      %50 = vmatpush.xpose.msra.mxu0 0.0
      %51 = vmatpush.xpose.msra.mxu0 0.0
      %52 = vmatpush.xpose.msra.mxu0 0.0
      %53 = vmatpush.xpose.msra.mxu0 0.0
      %54 = vmatpush.xpose.msra.mxu0 0.0
      %55 = vmatpush.xpose.msra.mxu0 0.0
      %56 = vmatpush.xpose.msra.mxu0 0.0
      %57 = vmatpush.xpose.msra.mxu0 0.0
      %58 = vmatpush.xpose.msra.mxu0 0.0
      %59 = vmatpush.xpose.msra.mxu0 0.0
      %60 = vmatpush.xpose.msra.mxu0 0.0
      %61 = vmatpush.xpose.msra.mxu0 0.0
      %62 = vmatpush.xpose.msra.mxu0 %v48
      %63 = vmatpush.xpose.msra.mxu0 %v45
      %64 = vmatpush.xpose.msra.mxu0 %v42
      %65 = vmatpush.xpose.msra.mxu0 %v39
      %66 = vmatmul.f32.gmra.mxu0 %v36
      %v67 = vpop.f32.mrf.mxu0
      %v68 = vadd.f32 %v32, %v67
      %69 = vdwg.mxu0
      %v70 = vld [vmem:[%s3] sm:$0xff]
      %v71 = vld [vmem:[%s3 + $0x8] sm:$0xff]
      %v72 = vld [vmem:[%s3 + $0x10] sm:$0xff]
      %v73 = vld [vmem:[%s3 + $0x18] sm:$0xff]
      %v75 = vsel %vm34, %v68, 0
      %77 = vmatpush.msra.mxu0 0.0
      %78 = vmatpush.msra.mxu0 0.0
      %79 = vmatpush.msra.mxu0 0.0
      %80 = vmatpush.msra.mxu0 0.0
      %81 = vmatpush.msra.mxu0 0.0
      %82 = vmatpush.msra.mxu0 0.0
      %83 = vmatpush.msra.mxu0 0.0
      %84 = vmatpush.msra.mxu0 0.0
      %85 = vmatpush.msra.mxu0 0.0
      %86 = vmatpush.msra.mxu0 0.0
      %87 = vmatpush.msra.mxu0 0.0
      %88 = vmatpush.msra.mxu0 0.0
      %89 = vmatpush.msra.mxu0 %v73
      %90 = vmatpush.msra.mxu0 %v72
      %91 = vmatpush.msra.mxu0 %v71
      %92 = vmatpush.msra.mxu0 %v70
      %93 = vmatmul.f32.gmra.mxu0 %v75
      %v94 = vpop.f32.mrf.mxu0
      %v95 = vadd.f32 0.0, %v94
      %96 = vdwg.mxu0
      %97 = vst.msk [vmem:[#allocation2] sm:$0xff] %vm34, %v95
    $region25: #{tpu_custom_call.1} parent=1 // pred_fallthru
      _
    %v98 = vld [vmem:[#allocation2] sm:$0xff]
    %v99 = vld [vmem:[%s4] sm:$0xff]
    %v100 = vld [vmem:[%s4 + $0x8] sm:$0xff]
    %v101 = vld [vmem:[%s4 + $0x10] sm:$0xff]
    %v102 = vld [vmem:[%s4 + $0x18] sm:$0xff]
    %v103 = vld [vmem:[%s4 + $0x20] sm:$0xff]
    %v104 = vld [vmem:[%s4 + $0x28] sm:$0xff]
    %v105 = vld [vmem:[%s4 + $0x30] sm:$0xff]
    %v106 = vld [vmem:[%s4 + $0x38] sm:$0xff]
    %v107 = vld [vmem:[%s4 + $0x40] sm:$0xff]
    %v108 = vld [vmem:[%s4 + $0x48] sm:$0xff]
    %v109 = vld [vmem:[%s4 + $0x50] sm:$0xff]
    %v110 = vld [vmem:[%s4 + $0x58] sm:$0xff]
    %v111 = vld [vmem:[%s4 + $0x60] sm:$0xff]
    %v112 = vld [vmem:[%s4 + $0x68] sm:$0xff]
    %v113 = vld [vmem:[%s4 + $0x70] sm:$0xff]
    %v114 = vld [vmem:[%s4 + $0x78] sm:$0xff]
    %vm115 = vcmask 261120
    %v117 = vsel %vm115, %v98, 0
    %v120 = vsel %vm115, %v99, 0
    %v123 = vsel %vm115, %v100, 0
    %v126 = vsel %vm115, %v101, 0
    %v129 = vsel %vm115, %v102, 0
    %v132 = vsel %vm115, %v103, 0
    %v135 = vsel %vm115, %v104, 0
    %v138 = vsel %vm115, %v105, 0
    %v141 = vsel %vm115, %v106, 0
    %v144 = vsel %vm115, %v107, 0
    %v147 = vsel %vm115, %v108, 0
    %v150 = vsel %vm115, %v109, 0
    %v153 = vsel %vm115, %v110, 0
    %v156 = vsel %vm115, %v111, 0
    %v159 = vsel %vm115, %v112, 0
    %v162 = vsel %vm115, %v113, 0
    %v165 = vsel %vm115, %v114, 0
    %167 = vmatpush.xpose.msra.mxu0 %v165
    %168 = vmatpush.xpose.msra.mxu0 %v162
    %169 = vmatpush.xpose.msra.mxu0 %v159
    %170 = vmatpush.xpose.msra.mxu0 %v156
    %171 = vmatpush.xpose.msra.mxu0 %v153
    %172 = vmatpush.xpose.msra.mxu0 %v150
    %173 = vmatpush.xpose.msra.mxu0 %v147
    %174 = vmatpush.xpose.msra.mxu0 %v144
    %175 = vmatpush.xpose.msra.mxu0 %v141
    %176 = vmatpush.xpose.msra.mxu0 %v138
    %177 = vmatpush.xpose.msra.mxu0 %v135
    %178 = vmatpush.xpose.msra.mxu0 %v132
    %179 = vmatpush.xpose.msra.mxu0 %v129
    %180 = vmatpush.xpose.msra.mxu0 %v126
    %181 = vmatpush.xpose.msra.mxu0 %v123
    %182 = vmatpush.xpose.msra.mxu0 %v120
    %183 = vmatmul.f32.gmra.mxu0 %v117
    %v184 = vpop.f32.mrf.mxu0
    %v185 = vadd.f32 0.0, %v184
    %186 = vdwg.mxu0
    %187 = vst [vmem:[#allocation3] sm:$0xff] %v185
    // Predicated region
    $region26: #{tpu_custom_call.1} parent=1 // pred_check
      _
    $region27: #{tpu_custom_call.1} parent=1 // pred_check_branch
      %189 = sbr.rel (0) target = $region29
    $region28: #{tpu_custom_call.1} parent=1 // pred_region
      %191 = vsyncadd [#allocation4], 0
      %s193 = sshll.u32 [#allocation3], 4
      %s194 = int_to_ptr.vmem [resolvable:$true] %s193
      %s195 = sshll.u32 %s5, 4
      %s196 = int_to_ptr.hbm [resolvable:$true] %s195
      %198 = dma.vmem_to_hbm [thread:$0]  %s194, 128, %s196, [#allocation4]
    $region29: #{tpu_custom_call.1} parent=1 // pred_fallthru
      _
    // Predicated region
    $region30: #{tpu_custom_call.1} parent=1 // pred_check
      _
    $region31: #{tpu_custom_call.1} parent=1 // pred_check_branch
      %200 = sbr.rel (0) target = $region33
    $region32: #{tpu_custom_call.1} parent=1 // pred_region
      %202 = dma.done [#allocation4], 128
    $region33: #{tpu_custom_call.1} parent=1 // pred_fallthru
      _
    %203 = vsyncpa [#allocation4], 1

</llo_original>
